<compile_context>
chip_gen: v6e
topology: v6e:2x2x1
jax: 0.10.0
libtpu: 0.0.40
codegen_flags: <defaults>
</compile_context>

<pallas_src>
import numpy as np
import jax
import jax.numpy as jnp
from jax.experimental import pallas as pl
from jax.experimental.pallas import tpu as pltpu

EMB_LEN = 16
N_TABLES = 6
VOCABS = (13, 6, 4, 4, 13, 90)                     # per-table vocab sizes
PARAGRAPH_IN_DIM = 22
PARAGRAPH_OUT_DIM = 128
VEC_DIM = PARAGRAPH_IN_DIM - N_TABLES              # 16
VPAD = 256                                         # lane-padded total vocab (130 -> 256)

_OFFSETS = np.concatenate([[0], np.cumsum(VOCABS)])[:-1].astype(np.int64)  # [0,13,19,23,27,40]
_TABLE_NAMES = [
    "video_duration_embedding", "video_width_embedding", "video_height_embedding",
    "video_rate_embedding", "video_size_embedding", "category_embedding",
]


def _round_up(x, m):
    return (x + m - 1) // m * m


# ---------------------------------------------------------------------------
# Pallas kernel: fused gather(+concat)+fc -> ReLU -> result_fc
# ---------------------------------------------------------------------------
def _fused_kernel(x_ref, sel_ref, offs_ref, embf_ref, w1v_ref, b1_ref,
                  w2_ref, b2_ref, o_ref):
    ids = x_ref[:, 0:N_TABLES].astype(jnp.bfloat16)             # [TM, 6]  (integer-valued)
    vec = x_ref[:, N_TABLES:PARAGRAPH_IN_DIM].astype(jnp.bfloat16)  # [TM, 16]

    # Broadcast each row's 6 ids across its table's lane band (one tiny MXU
    # matmul), then a single lane-iota equality yields the 6-hot matrix.
    idx = jnp.dot(ids, sel_ref[...], preferred_element_type=jnp.float32)
    idx = idx + offs_ref[...]                                   # [TM, VPAD], exact ints
    lane = jax.lax.broadcasted_iota(jnp.int32, idx.shape, 1)
    mh = (idx.astype(jnp.int32) == lane).astype(jnp.bfloat16)   # [TM, VPAD] 6-hot

    # First layer: pre-folded embedding rows (gather-as-matmul) + vec proj.
    h = jnp.dot(mh, embf_ref[...], preferred_element_type=jnp.float32)
    h = h + jnp.dot(vec, w1v_ref[...], preferred_element_type=jnp.float32)
    h = jnp.maximum(h + b1_ref[...], 0.0)                       # bias + ReLU in f32

    # Second layer.
    y = jnp.dot(h.astype(jnp.bfloat16), w2_ref[...],
                preferred_element_type=jnp.float32)
    o_ref[...] = (y + b2_ref[...]).astype(o_ref.dtype)


def _make_sel_offs():
    sel = np.zeros((N_TABLES, VPAD), np.float32)
    offs = np.full((1, VPAD), -1.0, np.float32)
    for i, v in enumerate(VOCABS):
        o = int(_OFFSETS[i])
        sel[i, o:o + v] = 1.0
        offs[0, o:o + v] = float(o)
    return jnp.asarray(sel, jnp.bfloat16), jnp.asarray(offs, jnp.float32)


def _fused_mlp(content, folded, *, tm=1024):
    """content: [B, 22] f32. Returns [B, 128] f32."""
    B = content.shape[0]
    tm_eff = min(_round_up(tm, 8), _round_up(B, 8))
    num_tiles = pl.cdiv(B, tm_eff)
    b_pad = num_tiles * tm_eff
    if b_pad != B:
        content = jnp.pad(content, ((0, b_pad - B), (0, 0)))

    sel, offs = _make_sel_offs()

    out = pl.pallas_call(
        _fused_kernel,
        out_shape=jax.ShapeDtypeStruct((b_pad, PARAGRAPH_OUT_DIM), jnp.float32),
        grid_spec=pltpu.PrefetchScalarGridSpec(
            num_scalar_prefetch=0,
            grid=(num_tiles,),
            in_specs=[
                pl.BlockSpec((tm_eff, PARAGRAPH_IN_DIM), lambda i: (i, 0)),   # content tile
                pl.BlockSpec((N_TABLES, VPAD), lambda i: (0, 0)),             # sel (resident)
                pl.BlockSpec((1, VPAD), lambda i: (0, 0)),                    # lane offsets
                pl.BlockSpec((VPAD, PARAGRAPH_OUT_DIM), lambda i: (0, 0)),    # folded emb tables
                pl.BlockSpec((VEC_DIM, PARAGRAPH_OUT_DIM), lambda i: (0, 0)), # W1 (vec slice)
                pl.BlockSpec((1, PARAGRAPH_OUT_DIM), lambda i: (0, 0)),       # b1
                pl.BlockSpec((PARAGRAPH_OUT_DIM, PARAGRAPH_OUT_DIM), lambda i: (0, 0)),  # W2
                pl.BlockSpec((1, PARAGRAPH_OUT_DIM), lambda i: (0, 0)),       # b2
            ],
            out_specs=pl.BlockSpec((tm_eff, PARAGRAPH_OUT_DIM), lambda i: (i, 0)),
        ),
        compiler_params=pltpu.CompilerParams(
            dimension_semantics=("parallel",)),
    )(content, sel, offs, folded["emb_fold"], folded["w1_vec"],
      folded["b1"], folded["w2"], folded["b2"])

    return out[:B] if b_pad != B else out


# ---------------------------------------------------------------------------
# Parameter init (mirrors PyTorch init_weights) and offline weight folding
# ---------------------------------------------------------------------------
def init_params(key):
    initrange = 1.0 / 4
    ks = jax.random.split(key, 8)

    def uni(k, shape):
        return jax.random.uniform(k, shape, jnp.float32, -initrange, initrange)

    params = {name: uni(ks[i], (VOCABS[i], EMB_LEN)) for i, name in enumerate(_TABLE_NAMES)}
    params.update({
        # Linear weights stored transposed: [in, out]
        "fc_w":        uni(ks[6], (N_TABLES * EMB_LEN + VEC_DIM, PARAGRAPH_OUT_DIM)),
        "fc_b":        jnp.zeros((1, PARAGRAPH_OUT_DIM), jnp.float32),
        "result_fc_w": uni(ks[7], (PARAGRAPH_OUT_DIM, PARAGRAPH_OUT_DIM)),
        "result_fc_b": jnp.zeros((1, PARAGRAPH_OUT_DIM), jnp.float32),
    })
    return params


def _fold_params(params):
    """Fold each embedding table through its slice of fc's weight."""
    w1 = params["fc_w"]                                            # [112, 128]
    embf = jnp.zeros((VPAD, PARAGRAPH_OUT_DIM), jnp.float32)
    for i, name in enumerate(_TABLE_NAMES):
        o, v = int(_OFFSETS[i]), VOCABS[i]
        proj = params[name] @ w1[i * EMB_LEN:(i + 1) * EMB_LEN]    # [vocab_i, 128]
        embf = embf.at[o:o + v].set(proj)
    return {
        "emb_fold": embf.astype(jnp.bfloat16),
        "w1_vec":   w1[N_TABLES * EMB_LEN:].astype(jnp.bfloat16),  # [16, 128]
        "b1":       params["fc_b"].astype(jnp.float32),
        "w2":       params["result_fc_w"].astype(jnp.bfloat16),
        "b2":       params["result_fc_b"].astype(jnp.float32),
    }


# ---------------------------------------------------------------------------
# Forward pass
# ---------------------------------------------------------------------------
def query_combined_features_forward(params, content, tm=1024):
    """content: [B, 22] float; columns 0..5 hold integer-valued ids."""
    folded = _fold_params(params)          # constant-folds under jit
    return _fused_mlp(content.astype(jnp.float32), folded, tm=tm)


# Pure-JAX f32 reference mirroring the PyTorch module.
def _reference_forward(params, content):
    ids = content[:, :N_TABLES].astype(jnp.int32)
    vec = content[:, N_TABLES:].astype(jnp.float32)
    embs = [jnp.take(params[name], ids[:, i], axis=0) for i, name in enumerate(_TABLE_NAMES)]
    x = jnp.concatenate(embs + [vec], axis=1)
    h = jnp.maximum(x @ params["fc_w"] + params["fc_b"], 0.0)
    return h @ params["result_fc_w"] + params["result_fc_b"]


if __name__ == "__main__":
    key = jax.random.PRNGKey(0)
    k_param, k_ids, k_vec = jax.random.split(key, 3)

    B = 8
    params = init_params(k_param)

    # content: [B, 22] — first 6 columns integer ids within vocab ranges.
    id_keys = jax.random.split(k_ids, N_TABLES)
    id_cols = [jax.random.randint(id_keys[i], (B,), 0, VOCABS[i]).astype(jnp.float32)
               for i in range(N_TABLES)]
    ids = jnp.stack(id_cols, axis=1)                               # [B, 6]
    vec = jax.random.normal(k_vec, (B, VEC_DIM), jnp.float32)      # [B, 16]
    content = jnp.concatenate([ids, vec], axis=1)                  # [B, 22]

    fwd = jax.jit(query_combined_features_forward)
    out = jax.block_until_ready(fwd(params, content))

    ref = _reference_forward(params, content)
    assert out.shape == (B, PARAGRAPH_OUT_DIM)
    assert out.dtype == jnp.float32
    max_err = float(jnp.max(jnp.abs(out - ref)))
    assert jnp.allclose(out, ref, atol=5e-2, rtol=5e-2), f"max abs err {max_err}"

    print("KERNEL_OK")
</pallas_src>

<mosaic_0001>
module attributes {stable_mosaic.version = 11 : i64} {
  func.func @_fused_kernel(%arg0: i32, %arg1: memref<8x22xf32, #tpu.memory_space<vmem>>, %arg2: memref<6x256xbf16, #tpu.memory_space<vmem>>, %arg3: memref<1x256xf32, #tpu.memory_space<vmem>>, %arg4: memref<256x128xbf16, #tpu.memory_space<vmem>>, %arg5: memref<16x128xbf16, #tpu.memory_space<vmem>>, %arg6: memref<1x128xf32, #tpu.memory_space<vmem>>, %arg7: memref<128x128xbf16, #tpu.memory_space<vmem>>, %arg8: memref<1x128xf32, #tpu.memory_space<vmem>>, %arg9: memref<8x128xf32, #tpu.memory_space<vmem>>) attributes {dimension_semantics = [#tpu.dimension_semantics<parallel>], iteration_bounds = array<i64: 1>, scalar_prefetch = 0 : i64, scratch_operands = 0 : i64, tpu.core_type = #tpu.core_type<tc>, window_params = [{transform_indices = @transform_0, window_bounds = array<i64: 8, 22>}, {pipeline_mode = #tpu.pipeline_mode<synchronous>, transform_indices = @transform_1, window_bounds = array<i64: 6, 256>}, {pipeline_mode = #tpu.pipeline_mode<synchronous>, transform_indices = @transform_2, window_bounds = array<i64: 1, 256>}, {pipeline_mode = #tpu.pipeline_mode<synchronous>, transform_indices = @transform_3, window_bounds = array<i64: 256, 128>}, {pipeline_mode = #tpu.pipeline_mode<synchronous>, transform_indices = @transform_4, window_bounds = array<i64: 16, 128>}, {pipeline_mode = #tpu.pipeline_mode<synchronous>, transform_indices = @transform_5, window_bounds = array<i64: 1, 128>}, {pipeline_mode = #tpu.pipeline_mode<synchronous>, transform_indices = @transform_6, window_bounds = array<i64: 128, 128>}, {pipeline_mode = #tpu.pipeline_mode<synchronous>, transform_indices = @transform_7, window_bounds = array<i64: 1, 128>}, {transform_indices = @transform_8, window_bounds = array<i64: 8, 128>}]} {
    %c0 = arith.constant 0 : index
    %c0_0 = arith.constant 0 : index
    %0 = vector.load %arg1[%c0, %c0_0] : memref<8x22xf32, #tpu.memory_space<vmem>>, vector<8x6xf32>
    %1 = arith.truncf %0 : vector<8x6xf32> to vector<8x6xbf16>
    %c0_1 = arith.constant 0 : index
    %c6 = arith.constant 6 : index
    %2 = vector.load %arg1[%c0_1, %c6] : memref<8x22xf32, #tpu.memory_space<vmem>>, vector<8x16xf32>
    %3 = arith.truncf %2 : vector<8x16xf32> to vector<8x16xbf16>
    %c0_2 = arith.constant 0 : index
    %c0_3 = arith.constant 0 : index
    %4 = vector.load %arg2[%c0_2, %c0_3] : memref<6x256xbf16, #tpu.memory_space<vmem>>, vector<6x256xbf16>
    %cst = arith.constant dense<0.000000e+00> : vector<8x256xf32>
    %5 = tpu.matmul %1, %4, %cst {dimension_numbers = #tpu.dot_dimension_numbers<[1], [0], [0], [1], [0, 0, 1, 1], [], []>} : vector<8x6xbf16>, vector<6x256xbf16>, vector<8x256xf32> -> vector<8x256xf32>
    %c0_4 = arith.constant 0 : index
    %c0_5 = arith.constant 0 : index
    %6 = vector.load %arg3[%c0_4, %c0_5] : memref<1x256xf32, #tpu.memory_space<vmem>>, vector<1x256xf32>
    %7 = vector.broadcast %6 : vector<1x256xf32> to vector<8x256xf32>
    %8 = arith.addf %5, %7 : vector<8x256xf32>
    %9 = tpu.iota {dimensions = array<i32: 1>} : vector<8x256xi32>
    %10 = arith.fptosi %8 : vector<8x256xf32> to vector<8x256xi32>
    %11 = arith.cmpi eq, %10, %9 : vector<8x256xi32>
    %12 = arith.extui %11 : vector<8x256xi1> to vector<8x256xi32>
    %13 = arith.sitofp %12 : vector<8x256xi32> to vector<8x256xf32>
    %14 = arith.truncf %13 : vector<8x256xf32> to vector<8x256xbf16>
    %c0_6 = arith.constant 0 : index
    %c0_7 = arith.constant 0 : index
    %15 = vector.load %arg4[%c0_6, %c0_7] : memref<256x128xbf16, #tpu.memory_space<vmem>>, vector<256x128xbf16>
    %cst_8 = arith.constant dense<0.000000e+00> : vector<8x128xf32>
    %16 = tpu.matmul %14, %15, %cst_8 {dimension_numbers = #tpu.dot_dimension_numbers<[1], [0], [0], [1], [0, 0, 1, 1], [], []>} : vector<8x256xbf16>, vector<256x128xbf16>, vector<8x128xf32> -> vector<8x128xf32>
    %c0_9 = arith.constant 0 : index
    %c0_10 = arith.constant 0 : index
    %17 = vector.load %arg5[%c0_9, %c0_10] : memref<16x128xbf16, #tpu.memory_space<vmem>>, vector<16x128xbf16>
    %cst_11 = arith.constant dense<0.000000e+00> : vector<8x128xf32>
    %18 = tpu.matmul %3, %17, %cst_11 {dimension_numbers = #tpu.dot_dimension_numbers<[1], [0], [0], [1], [0, 0, 1, 1], [], []>} : vector<8x16xbf16>, vector<16x128xbf16>, vector<8x128xf32> -> vector<8x128xf32>
    %19 = arith.addf %16, %18 : vector<8x128xf32>
    %c0_12 = arith.constant 0 : index
    %c0_13 = arith.constant 0 : index
    %20 = vector.load %arg6[%c0_12, %c0_13] : memref<1x128xf32, #tpu.memory_space<vmem>>, vector<1x128xf32>
    %21 = vector.broadcast %20 : vector<1x128xf32> to vector<8x128xf32>
    %22 = arith.addf %19, %21 : vector<8x128xf32>
    %cst_14 = arith.constant 0.000000e+00 : f32
    %23 = vector.broadcast %cst_14 : f32 to vector<8x128xf32>
    %24 = arith.maximumf %22, %23 : vector<8x128xf32>
    %25 = arith.truncf %24 : vector<8x128xf32> to vector<8x128xbf16>
    %c0_15 = arith.constant 0 : index
    %c0_16 = arith.constant 0 : index
    %26 = vector.load %arg7[%c0_15, %c0_16] : memref<128x128xbf16, #tpu.memory_space<vmem>>, vector<128x128xbf16>
    %cst_17 = arith.constant dense<0.000000e+00> : vector<8x128xf32>
    %27 = tpu.matmul %25, %26, %cst_17 {dimension_numbers = #tpu.dot_dimension_numbers<[1], [0], [0], [1], [0, 0, 1, 1], [], []>} : vector<8x128xbf16>, vector<128x128xbf16>, vector<8x128xf32> -> vector<8x128xf32>
    %c0_18 = arith.constant 0 : index
    %c0_19 = arith.constant 0 : index
    %28 = vector.load %arg8[%c0_18, %c0_19] : memref<1x128xf32, #tpu.memory_space<vmem>>, vector<1x128xf32>
    %29 = vector.broadcast %28 : vector<1x128xf32> to vector<8x128xf32>
    %30 = arith.addf %27, %29 : vector<8x128xf32>
    %c0_20 = arith.constant 0 : index
    %c0_21 = arith.constant 0 : index
    %31 = vector.load %arg9[%c0_20, %c0_21] : memref<8x128xf32, #tpu.memory_space<vmem>>, vector<8x128xf32>
    tpu.vector_store %arg9[%c0_20, %c0_21], %30 {strides = array<i32>} : memref<8x128xf32, #tpu.memory_space<vmem>>, vector<8x128xf32>,
    return
  }
  func.func @transform_0(%arg0: i32) -> (i32, i32) {
    %c0_i32 = arith.constant 0 : i32
    %c0_i32_0 = arith.constant 0 : i32
    return %arg0, %c0_i32 : i32, i32
  }
  func.func @transform_1(%arg0: i32) -> (i32, i32) {
    %c0_i32 = arith.constant 0 : i32
    %c0_i32_0 = arith.constant 0 : i32
    %c0_i32_1 = arith.constant 0 : i32
    return %c0_i32, %c0_i32_0 : i32, i32
  }
  func.func @transform_2(%arg0: i32) -> (i32, i32) {
    %c0_i32 = arith.constant 0 : i32
    %c0_i32_0 = arith.constant 0 : i32
    %c0_i32_1 = arith.constant 0 : i32
    return %c0_i32, %c0_i32_0 : i32, i32
  }
  func.func @transform_3(%arg0: i32) -> (i32, i32) {
    %c0_i32 = arith.constant 0 : i32
    %c0_i32_0 = arith.constant 0 : i32
    %c0_i32_1 = arith.constant 0 : i32
    return %c0_i32, %c0_i32_0 : i32, i32
  }
  func.func @transform_4(%arg0: i32) -> (i32, i32) {
    %c0_i32 = arith.constant 0 : i32
    %c0_i32_0 = arith.constant 0 : i32
    %c0_i32_1 = arith.constant 0 : i32
    return %c0_i32, %c0_i32_0 : i32, i32
  }
  func.func @transform_5(%arg0: i32) -> (i32, i32) {
    %c0_i32 = arith.constant 0 : i32
    %c0_i32_0 = arith.constant 0 : i32
    %c0_i32_1 = arith.constant 0 : i32
    return %c0_i32, %c0_i32_0 : i32, i32
  }
  func.func @transform_6(%arg0: i32) -> (i32, i32) {
    %c0_i32 = arith.constant 0 : i32
    %c0_i32_0 = arith.constant 0 : i32
    %c0_i32_1 = arith.constant 0 : i32
    return %c0_i32, %c0_i32_0 : i32, i32
  }
  func.func @transform_7(%arg0: i32) -> (i32, i32) {
    %c0_i32 = arith.constant 0 : i32
    %c0_i32_0 = arith.constant 0 : i32
    %c0_i32_1 = arith.constant 0 : i32
    return %c0_i32, %c0_i32_0 : i32, i32
  }
  func.func @transform_8(%arg0: i32) -> (i32, i32) {
    %c0_i32 = arith.constant 0 : i32
    %c0_i32_0 = arith.constant 0 : i32
    return %arg0, %c0_i32 : i32, i32
  }
}

</mosaic_0001>

<llo_original>
// kernel: query_combined_features_forward.1
$region0: #{query_combined_features_forward.1}
  #allocation0 [shape = 'u32[]', space=smem, size = 0x4, offset = 0x4, fixed_abs, tag = 'smem constant byte address 0x4 - core index']
  #allocation1 [shape = 'u32[144,128]{1,0:T(1,128)}', space=vmem, size = 0x12000, scoped, tag = 'internal scratch']
  %s0 = inlined_call_operand.vmem [shape: f32[8,22], index: 0, kind: input, shape index: {}]
  %s1 = inlined_call_operand.vmem [shape: bf16[6,256], index: 1, kind: input, shape index: {}]
  %s2 = inlined_call_operand.vmem [shape: f32[1,256], index: 2, kind: input, shape index: {}]
  %s3 = inlined_call_operand.vmem [shape: bf16[256,128], index: 3, kind: input, shape index: {}]
  %s4 = inlined_call_operand.vmem [shape: bf16[16,128], index: 4, kind: input, shape index: {}]
  %s5 = inlined_call_operand.vmem [shape: f32[1,128], index: 5, kind: input, shape index: {}]
  %s6 = inlined_call_operand.vmem [shape: bf16[128,128], index: 6, kind: input, shape index: {}]
  %s7 = inlined_call_operand.vmem [shape: f32[1,128], index: 7, kind: input, shape index: {}]
  %s8 = inlined_call_operand.hbm [shape: f32[8,128], index: 8, kind: output, shape index: {}]
  %s9 = sld [smem:[#allocation0]]
  $region42: #{query_combined_features_forward.1} parent=0
    _
  %s11 = ssub.s32 1, %s9
  %s12 = scalar_select 0, %s11, %s9
  $region1: #{query_combined_features_forward.1} parent=0
    #allocation2 [shape = 'u8[4096]{0}', space=vmem, size = 0x1000, scoped, tag = 'output window, operand 0, single buffered']
    #allocation3 [shape = 's32[1]{0}', space=sflag, size = 0x4, scoped, tag = 'scoped memory for query_combined_features_forward.1']
    %13 = vsyncpa [#allocation3], 0
    // Predicated region
    $region2: #{query_combined_features_forward.1} parent=1 // pred_check
      _
    $region3: #{query_combined_features_forward.1} parent=1 // pred_check_branch
      %15 = sbr.rel (0) target = $region5
    $region4: #{query_combined_features_forward.1} parent=1 // pred_region
      _
    $region5: #{query_combined_features_forward.1} parent=1 // pred_fallthru
      _
    // Predicated region
    $region6: #{query_combined_features_forward.1} parent=1 // pred_check
      _
    $region7: #{query_combined_features_forward.1} parent=1 // pred_check_branch
      %17 = sbr.rel (0) target = $region9
    $region8: #{query_combined_features_forward.1} parent=1 // pred_region
      _
    $region9: #{query_combined_features_forward.1} parent=1 // pred_fallthru
      _
    // Predicated region
    $region10: #{query_combined_features_forward.1} parent=1 // pred_check
      _
    $region11: #{query_combined_features_forward.1} parent=1 // pred_check_branch
      %19 = sbr.rel (0) target = $region13
    $region12: #{query_combined_features_forward.1} parent=1 // pred_region
      _
    $region13: #{query_combined_features_forward.1} parent=1 // pred_fallthru
      _
    // Predicated region
    $region14: #{query_combined_features_forward.1} parent=1 // pred_check
      _
    $region15: #{query_combined_features_forward.1} parent=1 // pred_check_branch
      %21 = sbr.rel (0) target = $region17
    $region16: #{query_combined_features_forward.1} parent=1 // pred_region
      _
    $region17: #{query_combined_features_forward.1} parent=1 // pred_fallthru
      _
    // Predicated region
    $region18: #{query_combined_features_forward.1} parent=1 // pred_check
      _
    $region19: #{query_combined_features_forward.1} parent=1 // pred_check_branch
      %23 = sbr.rel (0) target = $region21
    $region20: #{query_combined_features_forward.1} parent=1 // pred_region
      _
    $region21: #{query_combined_features_forward.1} parent=1 // pred_fallthru
      _
    // Predicated region
    $region22: #{query_combined_features_forward.1} parent=1 // pred_check
      _
    $region23: #{query_combined_features_forward.1} parent=1 // pred_check_branch
      %25 = sbr.rel (0) target = $region25
    $region24: #{query_combined_features_forward.1} parent=1 // pred_region
      _
    $region25: #{query_combined_features_forward.1} parent=1 // pred_fallthru
      _
    // Predicated region
    $region26: #{query_combined_features_forward.1} parent=1 // pred_check
      _
    $region27: #{query_combined_features_forward.1} parent=1 // pred_check_branch
      %27 = sbr.rel (0) target = $region29
    $region28: #{query_combined_features_forward.1} parent=1 // pred_region
      _
    $region29: #{query_combined_features_forward.1} parent=1 // pred_fallthru
      _
    // Predicated region
    $region30: #{query_combined_features_forward.1} parent=1 // pred_check
      _
    $region31: #{query_combined_features_forward.1} parent=1 // pred_check_branch
      %29 = sbr.rel (0) target = $region33
    $region32: #{query_combined_features_forward.1} parent=1 // pred_region
      _
    $region33: #{query_combined_features_forward.1} parent=1 // pred_fallthru
      _
    %v31 = vld [vmem:[%s0] sm:$0xff]
    %v32 = vpack.c.bf16 %v31, %v31
    %v33 = vld [vmem:[%s1] sm:$0x77]
    %v34 = vld [vmem:[%s2] sm:$0x3]
    %v36 = vlaneseq
    %v37 = vshrl.u32 %v36, 7
    %v38 = vsub.s32 0, %v37
    %v39 = vrot.slane %v34, %v38
    %v40 = vlaneseq
    %v41 = vshrl.u32 %v40, 7
    %v42 = vsub.s32 1, %v41
    %v43 = vrot.slane %v34, %v42
    %v47 = vunpack.c.l.b16 %v33
    %v48 = vunpack.c.h.b16 %v33
    %v49 = vpack.c.b16 %v47, %v47
    %v50 = vpack.c.b16 %v48, %v48
    %vm51 = vcmask 48128
    %v53 = vsel %vm51, %v32, 0
    %vm55 = vcmask 1042432
    %v57 = vsel %vm55, %v49, 0
    %v60 = vsel %vm55, %v50, 0
    %62 = vmatprep.subr.bf16.mxu0 0
    %63 = vmatpush1.bf16.msra.mxu0 0
    %64 = vmatprep.subr.bf16.mxu0 0
    %65 = vmatpush1.bf16.msra.mxu0 0
    %66 = vmatprep.subr.bf16.mxu0 0
    %67 = vmatpush1.bf16.msra.mxu0 0
    %68 = vmatprep.subr.bf16.mxu0 0
    %69 = vmatpush1.bf16.msra.mxu0 0
    %70 = vmatprep.subr.bf16.mxu0 0
    %71 = vmatpush1.bf16.msra.mxu0 0
    %72 = vmatprep.subr.bf16.mxu0 0
    %73 = vmatpush1.bf16.msra.mxu0 0
    %74 = vmatprep.subr.bf16.mxu0 0
    %75 = vmatpush1.bf16.msra.mxu0 0
    %76 = vmatprep.subr.bf16.mxu0 %v60
    %77 = vmatpush1.bf16.msra.mxu0 %v57
    %78 = vmatprep.subr.bf16.mxu0 0
    %79 = vmatpush2.bf16.msra.mxu0 0
    %80 = vmatprep.subr.bf16.mxu0 0
    %81 = vmatpush2.bf16.msra.mxu0 0
    %82 = vmatprep.subr.bf16.mxu0 0
    %83 = vmatpush2.bf16.msra.mxu0 0
    %84 = vmatprep.subr.bf16.mxu0 0
    %85 = vmatpush2.bf16.msra.mxu0 0
    %86 = vmatprep.subr.bf16.mxu0 0
    %87 = vmatpush2.bf16.msra.mxu0 0
    %88 = vmatprep.subr.bf16.mxu0 0
    %89 = vmatpush2.bf16.msra.mxu0 0
    %90 = vmatprep.subr.bf16.mxu0 0
    %91 = vmatpush2.bf16.msra.mxu0 0
    %92 = vmatprep.subr.bf16.mxu0 0
    %93 = vmatpush2.bf16.msra.mxu0 0
    %94 = vmatprep.mubr.bf16.mxu0 0
    %95 = vmatmul.mubr.bf16.gmra.mxu0 %v53
    %v96 = vpop.f32.mrf.mxu0
    %v97 = vadd.f32 %v39, %v96
    %v98 = vpop.f32.mrf.mxu0
    %v99 = vadd.f32 %v43, %v98
    %v100 = vpop.f32.mrf.mxu0
    %v101 = vpop.f32.mrf.mxu0
    %102 = vdwg.mxu0
    %v103 = vlaneseq
    %v104 = vand.u32 %v103, 127
    %v105 = vadd.s32 %v104, 128
    %v106 = vcvt.f32.s32.to.zero.pseudo %v97
    %v107 = vcvt.f32.s32.to.zero.pseudo %v99
    %vm108 = vcmp.eq.s32.totalorder %v106, %v104
    %vm109 = vcmp.eq.s32.totalorder %v107, %v105
    %v110 = vsel %vm108, 1, 0
    %v111 = vsel %vm109, 1, 0
    %v112 = vcvt.s32.f32 %v110
    %v113 = vcvt.s32.f32 %v111
    %v114 = vpack.c.bf16 %v112, %v112
    %v115 = vpack.c.bf16 %v113, %v113
    %v116 = vld [vmem:[%s3] sm:$0xf]
    %v117 = vld [vmem:[%s3 + $0x4] sm:$0xf]
    %v118 = vld [vmem:[%s3 + $0x8] sm:$0xf]
    %v119 = vld [vmem:[%s3 + $0xc] sm:$0xf]
    %v120 = vld [vmem:[%s3 + $0x10] sm:$0xf]
    %v121 = vld [vmem:[%s3 + $0x14] sm:$0xf]
    %v122 = vld [vmem:[%s3 + $0x18] sm:$0xf]
    %v123 = vld [vmem:[%s3 + $0x1c] sm:$0xf]
    %v124 = vld [vmem:[%s3 + $0x20] sm:$0xf]
    %v125 = vld [vmem:[%s3 + $0x24] sm:$0xf]
    %v126 = vld [vmem:[%s3 + $0x28] sm:$0xf]
    %v127 = vld [vmem:[%s3 + $0x2c] sm:$0xf]
    %v128 = vld [vmem:[%s3 + $0x30] sm:$0xf]
    %v129 = vld [vmem:[%s3 + $0x34] sm:$0xf]
    %v130 = vld [vmem:[%s3 + $0x38] sm:$0xf]
    %v131 = vld [vmem:[%s3 + $0x3c] sm:$0xf]
    %v132 = vld [vmem:[%s3 + $0x40] sm:$0xf]
    %v133 = vld [vmem:[%s3 + $0x44] sm:$0xf]
    %v134 = vld [vmem:[%s3 + $0x48] sm:$0xf]
    %v135 = vld [vmem:[%s3 + $0x4c] sm:$0xf]
    %v136 = vld [vmem:[%s3 + $0x50] sm:$0xf]
    %v137 = vld [vmem:[%s3 + $0x54] sm:$0xf]
    %v138 = vld [vmem:[%s3 + $0x58] sm:$0xf]
    %v139 = vld [vmem:[%s3 + $0x5c] sm:$0xf]
    %v140 = vld [vmem:[%s3 + $0x60] sm:$0xf]
    %v141 = vld [vmem:[%s3 + $0x64] sm:$0xf]
    %v142 = vld [vmem:[%s3 + $0x68] sm:$0xf]
    %v143 = vld [vmem:[%s3 + $0x6c] sm:$0xf]
    %v144 = vld [vmem:[%s3 + $0x70] sm:$0xf]
    %v145 = vld [vmem:[%s3 + $0x74] sm:$0xf]
    %v146 = vld [vmem:[%s3 + $0x78] sm:$0xf]
    %v147 = vld [vmem:[%s3 + $0x7c] sm:$0xf]
    %v148 = vld [vmem:[%s4] sm:$0xf]
    %v149 = vld [vmem:[%s4 + $0x4] sm:$0xf]
    %151 = vrot.lane.b32.xlu0 %v32, 122
    %v152 = vpop.permute.xlu0 %151
    %v155 = vunpack.c.l.b16 %v148
    %v156 = vunpack.c.l.b16 %v149
    %v157 = vpack.c.b16 %v156, %v155
    %vm159 = vcmask 130048
    %v161 = vsel %vm159, %v152, 0
    %163 = vmatprep.subr.bf16.mxu0 0
    %164 = vmatpush1.bf16.msra.mxu0 0
    %165 = vmatprep.subr.bf16.mxu0 0
    %166 = vmatpush1.bf16.msra.mxu0 0
    %167 = vmatprep.subr.bf16.mxu0 0
    %168 = vmatpush1.bf16.msra.mxu0 0
    %169 = vmatprep.subr.bf16.mxu0 0
    %170 = vmatpush1.bf16.msra.mxu0 0
    %171 = vmatprep.subr.bf16.mxu0 0
    %172 = vmatpush1.bf16.msra.mxu0 0
    %173 = vmatprep.subr.bf16.mxu0 0
    %174 = vmatpush1.bf16.msra.mxu0 0
    %175 = vmatprep.subr.bf16.mxu0 0
    %176 = vmatpush1.bf16.msra.mxu0 0
    %177 = vmatprep.subr.bf16.mxu0 0
    %178 = vmatpush1.bf16.msra.mxu0 %v157
    %179 = vmatprep.subr.bf16.mxu0 0
    %180 = vmatpush2.bf16.msra.mxu0 0
    %181 = vmatprep.subr.bf16.mxu0 0
    %182 = vmatpush2.bf16.msra.mxu0 0
    %183 = vmatprep.subr.bf16.mxu0 0
    %184 = vmatpush2.bf16.msra.mxu0 0
    %185 = vmatprep.subr.bf16.mxu0 0
    %186 = vmatpush2.bf16.msra.mxu0 0
    %187 = vmatprep.subr.bf16.mxu0 0
    %188 = vmatpush2.bf16.msra.mxu0 0
    %189 = vmatprep.subr.bf16.mxu0 0
    %190 = vmatpush2.bf16.msra.mxu0 0
    %191 = vmatprep.subr.bf16.mxu0 0
    %192 = vmatpush2.bf16.msra.mxu0 0
    %193 = vmatprep.subr.bf16.mxu0 0
    %194 = vmatpush2.bf16.msra.mxu0 0
    %195 = vmatprep.mubr.bf16.mxu0 0
    %196 = vmatmul.mubr.bf16.gmra.mxu0 %v161
    %v197 = vpop.f32.mrf.mxu0
    %v198 = vadd.f32 0.0, %v197
    %v199 = vpop.f32.mrf.mxu0
    %v200 = vpop.f32.mrf.mxu0
    %v201 = vpop.f32.mrf.mxu0
    %202 = vdwg.mxu0
    %v235 = vunpack.c.l.b16 %v116
    %v236 = vunpack.c.l.b16 %v117
    %v237 = vunpack.c.l.b16 %v118
    %v238 = vunpack.c.l.b16 %v119
    %v239 = vunpack.c.l.b16 %v120
    %v240 = vunpack.c.l.b16 %v121
    %v241 = vunpack.c.l.b16 %v122
    %v242 = vunpack.c.l.b16 %v123
    %v243 = vunpack.c.l.b16 %v124
    %v244 = vunpack.c.l.b16 %v125
    %v245 = vunpack.c.l.b16 %v126
    %v246 = vunpack.c.l.b16 %v127
    %v247 = vunpack.c.l.b16 %v128
    %v248 = vunpack.c.l.b16 %v129
    %v249 = vunpack.c.l.b16 %v130
    %v250 = vunpack.c.l.b16 %v131
    %v251 = vunpack.c.l.b16 %v132
    %v252 = vunpack.c.l.b16 %v133
    %v253 = vunpack.c.l.b16 %v134
    %v254 = vunpack.c.l.b16 %v135
    %v255 = vunpack.c.l.b16 %v136
    %v256 = vunpack.c.l.b16 %v137
    %v257 = vunpack.c.l.b16 %v138
    %v258 = vunpack.c.l.b16 %v139
    %v259 = vunpack.c.l.b16 %v140
    %v260 = vunpack.c.l.b16 %v141
    %v261 = vunpack.c.l.b16 %v142
    %v262 = vunpack.c.l.b16 %v143
    %v263 = vunpack.c.l.b16 %v144
    %v264 = vunpack.c.l.b16 %v145
    %v265 = vunpack.c.l.b16 %v146
    %v266 = vunpack.c.l.b16 %v147
    %v267 = vpack.c.b16 %v236, %v235
    %v268 = vpack.c.b16 %v238, %v237
    %v269 = vpack.c.b16 %v240, %v239
    %v270 = vpack.c.b16 %v242, %v241
    %v271 = vpack.c.b16 %v244, %v243
    %v272 = vpack.c.b16 %v246, %v245
    %v273 = vpack.c.b16 %v248, %v247
    %v274 = vpack.c.b16 %v250, %v249
    %v275 = vpack.c.b16 %v252, %v251
    %v276 = vpack.c.b16 %v254, %v253
    %v277 = vpack.c.b16 %v256, %v255
    %v278 = vpack.c.b16 %v258, %v257
    %v279 = vpack.c.b16 %v260, %v259
    %v280 = vpack.c.b16 %v262, %v261
    %v281 = vpack.c.b16 %v264, %v263
    %v282 = vpack.c.b16 %v266, %v265
    %299 = vmatprep.subr.bf16.mxu0 0
    %300 = vmatpush1.bf16.msra.mxu0 %v274
    %301 = vmatprep.subr.bf16.mxu0 0
    %302 = vmatpush1.bf16.msra.mxu0 %v273
    %303 = vmatprep.subr.bf16.mxu0 0
    %304 = vmatpush1.bf16.msra.mxu0 %v272
    %305 = vmatprep.subr.bf16.mxu0 0
    %306 = vmatpush1.bf16.msra.mxu0 %v271
    %307 = vmatprep.subr.bf16.mxu0 0
    %308 = vmatpush1.bf16.msra.mxu0 %v270
    %309 = vmatprep.subr.bf16.mxu0 0
    %310 = vmatpush1.bf16.msra.mxu0 %v269
    %311 = vmatprep.subr.bf16.mxu0 0
    %312 = vmatpush1.bf16.msra.mxu0 %v268
    %313 = vmatprep.subr.bf16.mxu0 0
    %314 = vmatpush1.bf16.msra.mxu0 %v267
    %315 = vmatprep.subr.bf16.mxu0 0
    %316 = vmatpush2.bf16.msra.mxu0 %v282
    %317 = vmatprep.subr.bf16.mxu0 0
    %318 = vmatpush2.bf16.msra.mxu0 %v281
    %319 = vmatprep.subr.bf16.mxu0 0
    %320 = vmatpush2.bf16.msra.mxu0 %v280
    %321 = vmatprep.subr.bf16.mxu0 0
    %322 = vmatpush2.bf16.msra.mxu0 %v279
    %323 = vmatprep.subr.bf16.mxu0 0
    %324 = vmatpush2.bf16.msra.mxu0 %v278
    %325 = vmatprep.subr.bf16.mxu0 0
    %326 = vmatpush2.bf16.msra.mxu0 %v277
    %327 = vmatprep.subr.bf16.mxu0 0
    %328 = vmatpush2.bf16.msra.mxu0 %v276
    %329 = vmatprep.subr.bf16.mxu0 0
    %330 = vmatpush2.bf16.msra.mxu0 %v275
    %331 = vmatprep.mubr.bf16.mxu0 %v115
    %332 = vmatmul.mubr.bf16.gmra.mxu0 %v114
    %v333 = vpop.f32.mrf.mxu0
    %v334 = vadd.f32 %v198, %v333
    %v335 = vpop.f32.mrf.mxu0
    %v336 = vpop.f32.mrf.mxu0
    %v337 = vpop.f32.mrf.mxu0
    %338 = vdwg.mxu0
    %v339 = vld [vmem:[%s5] sm:$0x1]
    %v341 = vlaneseq
    %v342 = vshrl.u32 %v341, 7
    %v343 = vsub.s32 0, %v342
    %v344 = vrot.slane %v339, %v343
    %v346 = vadd.f32 %v334, %v344
    %v347 = vmax.f32 %v346, 0.0
    %v348 = vpack.c.bf16 %v347, %v347
    %v349 = vld [vmem:[%s6] sm:$0xf]
    %v350 = vld [vmem:[%s6 + $0x4] sm:$0xf]
    %v351 = vld [vmem:[%s6 + $0x8] sm:$0xf]
    %v352 = vld [vmem:[%s6 + $0xc] sm:$0xf]
    %v353 = vld [vmem:[%s6 + $0x10] sm:$0xf]
    %v354 = vld [vmem:[%s6 + $0x14] sm:$0xf]
    %v355 = vld [vmem:[%s6 + $0x18] sm:$0xf]
    %v356 = vld [vmem:[%s6 + $0x1c] sm:$0xf]
    %v357 = vld [vmem:[%s6 + $0x20] sm:$0xf]
    %v358 = vld [vmem:[%s6 + $0x24] sm:$0xf]
    %v359 = vld [vmem:[%s6 + $0x28] sm:$0xf]
    %v360 = vld [vmem:[%s6 + $0x2c] sm:$0xf]
    %v361 = vld [vmem:[%s6 + $0x30] sm:$0xf]
    %v362 = vld [vmem:[%s6 + $0x34] sm:$0xf]
    %v363 = vld [vmem:[%s6 + $0x38] sm:$0xf]
    %v364 = vld [vmem:[%s6 + $0x3c] sm:$0xf]
    %v365 = vld [vmem:[%s7] sm:$0x1]
    %v367 = vlaneseq
    %v368 = vshrl.u32 %v367, 7
    %v369 = vsub.s32 0, %v368
    %v370 = vrot.slane %v365, %v369
    %v388 = vunpack.c.l.b16 %v349
    %v389 = vunpack.c.l.b16 %v350
    %v390 = vunpack.c.l.b16 %v351
    %v391 = vunpack.c.l.b16 %v352
    %v392 = vunpack.c.l.b16 %v353
    %v393 = vunpack.c.l.b16 %v354
    %v394 = vunpack.c.l.b16 %v355
    %v395 = vunpack.c.l.b16 %v356
    %v396 = vunpack.c.l.b16 %v357
    %v397 = vunpack.c.l.b16 %v358
    %v398 = vunpack.c.l.b16 %v359
    %v399 = vunpack.c.l.b16 %v360
    %v400 = vunpack.c.l.b16 %v361
    %v401 = vunpack.c.l.b16 %v362
    %v402 = vunpack.c.l.b16 %v363
    %v403 = vunpack.c.l.b16 %v364
    %v404 = vpack.c.b16 %v389, %v388
    %v405 = vpack.c.b16 %v391, %v390
    %v406 = vpack.c.b16 %v393, %v392
    %v407 = vpack.c.b16 %v395, %v394
    %v408 = vpack.c.b16 %v397, %v396
    %v409 = vpack.c.b16 %v399, %v398
    %v410 = vpack.c.b16 %v401, %v400
    %v411 = vpack.c.b16 %v403, %v402
    %420 = vmatprep.subr.bf16.mxu0 0
    %421 = vmatpush1.bf16.msra.mxu0 %v411
    %422 = vmatprep.subr.bf16.mxu0 0
    %423 = vmatpush1.bf16.msra.mxu0 %v410
    %424 = vmatprep.subr.bf16.mxu0 0
    %425 = vmatpush1.bf16.msra.mxu0 %v409
    %426 = vmatprep.subr.bf16.mxu0 0
    %427 = vmatpush1.bf16.msra.mxu0 %v408
    %428 = vmatprep.subr.bf16.mxu0 0
    %429 = vmatpush1.bf16.msra.mxu0 %v407
    %430 = vmatprep.subr.bf16.mxu0 0
    %431 = vmatpush1.bf16.msra.mxu0 %v406
    %432 = vmatprep.subr.bf16.mxu0 0
    %433 = vmatpush1.bf16.msra.mxu0 %v405
    %434 = vmatprep.subr.bf16.mxu0 0
    %435 = vmatpush1.bf16.msra.mxu0 %v404
    %436 = vmatprep.subr.bf16.mxu0 0
    %437 = vmatpush2.bf16.msra.mxu0 0
    %438 = vmatprep.subr.bf16.mxu0 0
    %439 = vmatpush2.bf16.msra.mxu0 0
    %440 = vmatprep.subr.bf16.mxu0 0
    %441 = vmatpush2.bf16.msra.mxu0 0
    %442 = vmatprep.subr.bf16.mxu0 0
    %443 = vmatpush2.bf16.msra.mxu0 0
    %444 = vmatprep.subr.bf16.mxu0 0
    %445 = vmatpush2.bf16.msra.mxu0 0
    %446 = vmatprep.subr.bf16.mxu0 0
    %447 = vmatpush2.bf16.msra.mxu0 0
    %448 = vmatprep.subr.bf16.mxu0 0
    %449 = vmatpush2.bf16.msra.mxu0 0
    %450 = vmatprep.subr.bf16.mxu0 0
    %451 = vmatpush2.bf16.msra.mxu0 0
    %452 = vmatprep.mubr.bf16.mxu0 0
    %453 = vmatmul.mubr.bf16.gmra.mxu0 %v348
    %v454 = vpop.f32.mrf.mxu0
    %v455 = vadd.f32 %v370, %v454
    %v456 = vpop.f32.mrf.mxu0
    %v457 = vpop.f32.mrf.mxu0
    %v458 = vpop.f32.mrf.mxu0
    %459 = vdwg.mxu0
    %460 = vst [vmem:[#allocation2] sm:$0xff] %v455
    // Predicated region
    $region34: #{query_combined_features_forward.1} parent=1 // pred_check
      _
    $region35: #{query_combined_features_forward.1} parent=1 // pred_check_branch
      %462 = sbr.rel (0) target = $region37
    $region36: #{query_combined_features_forward.1} parent=1 // pred_region
      %s464 = ssub.s32 128, 128
      %465 = vsyncadd [#allocation3], %s464
      %s467 = sshll.u32 [#allocation2], 4
      %s468 = int_to_ptr.vmem [resolvable:$true] %s467
      %470 = dma.vmem_to_hbm [thread:$0]  %s468, 128, %s8, [#allocation3]
    $region37: #{query_combined_features_forward.1} parent=1 // pred_fallthru
      _
    // Predicated region
    $region38: #{query_combined_features_forward.1} parent=1 // pred_check
      _
    $region39: #{query_combined_features_forward.1} parent=1 // pred_check_branch
      %472 = sbr.rel (0) target = $region41
    $region40: #{query_combined_features_forward.1} parent=1 // pred_region
      %473 = dma.done [#allocation3], 128
    $region41: #{query_combined_features_forward.1} parent=1 // pred_fallthru
      _
    %474 = vsyncpa [#allocation3], 1

</llo_original>
